<compile_context>
chip_gen: v5e
topology: v5e:2x2
jax: 0.10.0
libtpu: 0.0.40
codegen_flags: <defaults>
</compile_context>

<pallas_src>
import jax
import jax.numpy as jnp
from jax import lax
from jax.experimental import pallas as pl
from jax.experimental.pallas import tpu as pltpu

C1 = 5                        # input channels
CE = 2                        # expansion channels selected (top-k)
CN = C1 * (C1 - 1) // 2       # candidate pairs = 10
M = 2 * C1                    # flattened output columns: b*C1 + c


def _hadamard_expansion_kernel(tau_ref, logits_ref, gumbel_ref, candis_ref, out_ref):
    """Single invocation (no grid); all operands are tiny full-array blocks.

    tau_ref    : SMEM (1,)    f32  raw (unclamped) temperature parameter
    logits_ref : VMEM (1, CN) f32  candidate logits
    gumbel_ref : VMEM (1, CN) f32  Gumbel(0,1) noise (sampled in the wrapper)
    candis_ref : VMEM (CN, M) f32  candis_met laid out as [k, b*C1 + c]
    out_ref    : VMEM (CE, M) f32  selected_met laid out as [r, b*C1 + c]
    """
    # tau.data = clamp(tau, 0.1, 4.0).  Kept (exact) because the soft mask
    # values scale the output rows; only the top-k *indices* are tau-invariant.
    tau = jnp.clip(tau_ref[0], jnp.float32(0.1), jnp.float32(4.0))

    # Perturbed logits and exact soft gumbel-softmax mask.
    z = (logits_ref[...] + gumbel_ref[...]) / tau                   # (1, CN)
    zmax = jnp.max(z, axis=-1, keepdims=True)
    e = jnp.exp(z - zmax)                                           # EUP
    mask = e / jnp.sum(e, axis=-1, keepdims=True)                   # (1, CN)

    # topk(mask, 2).indices == topk(z, 2).indices (softmax is strictly monotone).
    lane = lax.broadcasted_iota(jnp.int32, (1, CN), 1)
    idx1 = jnp.min(jnp.where(z == zmax, lane, CN), axis=-1, keepdims=True)
    z2 = jnp.where(lane == idx1, -jnp.inf, z)
    zmax2 = jnp.max(z2, axis=-1, keepdims=True)
    idx2 = jnp.min(jnp.where(z2 == zmax2, lane, CN), axis=-1, keepdims=True)

    # candis_to_ce[r] = one_hot(idx_r) * mask  ->  only mask[idx_r] survives.
    w1 = jnp.sum(jnp.where(lane == idx1, mask, 0.0), axis=-1, keepdims=True)  # (1,1)
    w2 = jnp.sum(jnp.where(lane == idx2, mask, 0.0), axis=-1, keepdims=True)  # (1,1)

    # selected_met = candis_to_ce @ candis_met == w_r * candis_met[:, idx_r, :].
    # One-hot row gather as a masked sublane reduce (VPU select + XLU reduce);
    # kept off the MXU on purpose (2 useful rows -> issue/drain pure latency).
    krow = lax.broadcasted_iota(jnp.int32, (CN, M), 0)
    cm = candis_ref[...]
    row1 = jnp.sum(jnp.where(krow == idx1, cm, 0.0), axis=0, keepdims=True)   # (1, M)
    row2 = jnp.sum(jnp.where(krow == idx2, cm, 0.0), axis=0, keepdims=True)   # (1, M)

    out_ref[0:1, :] = w1 * row1
    out_ref[1:2, :] = w2 * row2


@jax.jit
def hadamard_expansion_forward(logits, tau, candis_met, key):
    """Training-mode forward of HadamardExpansion: returns selected_met.

    logits: (CN,) f32, tau: scalar f32, candis_met: (2, CN, C1) f32, key: PRNG key.
    Returns selected_met of shape (2, CE, C1) (== candis_to_ce @ candis_met).
    """
    gumbel = jax.random.gumbel(key, (CN,), dtype=jnp.float32)

    logits_row = jnp.asarray(logits, jnp.float32).reshape(1, CN)
    gumbel_row = gumbel.reshape(1, CN)
    # Lane-major buffer layout for the kernel: column index = b*C1 + c.
    candis_flat = jnp.transpose(jnp.asarray(candis_met, jnp.float32),
                                (1, 0, 2)).reshape(CN, M)
    tau_arr = jnp.asarray(tau, jnp.float32).reshape(1)

    out_flat = pl.pallas_call(
        _hadamard_expansion_kernel,
        out_shape=jax.ShapeDtypeStruct((CE, M), jnp.float32),
        in_specs=[
            pl.BlockSpec(memory_space=pltpu.MemorySpace.SMEM),   # tau scalar
            pl.BlockSpec(memory_space=pltpu.MemorySpace.VMEM),   # logits (1, CN)
            pl.BlockSpec(memory_space=pltpu.MemorySpace.VMEM),   # gumbel (1, CN)
            pl.BlockSpec(memory_space=pltpu.MemorySpace.VMEM),   # candis (CN, M)
        ],
        out_specs=pl.BlockSpec(memory_space=pltpu.MemorySpace.VMEM),
        cost_estimate=pl.CostEstimate(
            flops=512, transcendentals=CN,
            bytes_accessed=4 * (3 * CN + CN * M + CE * M)),
    )(tau_arr, logits_row, gumbel_row, candis_flat)

    # out_flat[r, b*C1 + c] -> selected_met[b, r, c]
    return jnp.transpose(out_flat.reshape(CE, 2, C1), (1, 0, 2))


def _reference_forward(logits, tau, candis_met, key):
    """Pure-JAX reference of the module's training forward (selected_met)."""
    gumbel = jax.random.gumbel(key, (CN,), dtype=jnp.float32)
    t = jnp.clip(jnp.asarray(tau, jnp.float32), 0.1, 4.0)
    mask = jax.nn.softmax((jnp.asarray(logits, jnp.float32) + gumbel) / t)
    topk_idx = lax.top_k(mask, CE)[1]
    candis_to_ce = jax.nn.one_hot(topk_idx, CN, dtype=jnp.float32) * mask[None, :]
    return jnp.einsum("rk,bkc->brc", candis_to_ce,
                      jnp.asarray(candis_met, jnp.float32))


def _build_candis_met(c1):
    """Dense candis_met buffer from the module __init__: (2, CN, c1)."""
    cn = c1 * (c1 - 1) // 2
    met = [[[0.0] * c1 for _ in range(cn)] for _ in range(2)]
    k = 0
    for i in range(c1):
        for j in range(i + 1, c1):
            met[0][k][i] = 1.0
            met[1][k][j] = 1.0
            k += 1
    return jnp.asarray(met, dtype=jnp.float32)


if __name__ == "__main__":
    root = jax.random.PRNGKey(0)
    k_logits, k_gumbel = jax.random.split(root, 2)

    # Deterministic parameter/buffer init matching the module __init__.
    logits = jax.random.uniform(k_logits, (CN,), jnp.float32,
                                minval=-0.1, maxval=0.1)     # nn.Parameter
    tau = jnp.float32(2.0)                                   # nn.Parameter(2.0)
    candis_met = _build_candis_met(C1)                       # buffer (2, 10, 5)

    selected_met = hadamard_expansion_forward(logits, tau, candis_met, k_gumbel)
    selected_met = jax.block_until_ready(selected_met)

    ref = _reference_forward(logits, tau, candis_met, k_gumbel)
    assert selected_met.shape == (2, CE, C1) and selected_met.dtype == jnp.float32
    assert bool(jnp.allclose(selected_met, ref, rtol=1e-4, atol=1e-5))
    print("KERNEL_OK")
</pallas_src>

<mosaic_0001>
module attributes {stable_mosaic.version = 11 : i64} {
  func.func @_hadamard_expansion_kernel(%arg0: memref<1xf32, #tpu.memory_space<smem>>, %arg1: memref<1x10xf32, #tpu.memory_space<vmem>>, %arg2: memref<1x10xf32, #tpu.memory_space<vmem>>, %arg3: memref<10x10xf32, #tpu.memory_space<vmem>>, %arg4: memref<2x10xf32, #tpu.memory_space<vmem>>) attributes {dimension_semantics = [], scalar_prefetch = 0 : i64, scratch_operands = 0 : i64, tpu.core_type = #tpu.core_type<tc>} {
    %c0 = arith.constant 0 : index
    %0 = memref.load %arg0[%c0] : memref<1xf32, #tpu.memory_space<smem>>
    %cst = arith.constant 1.000000e-01 : f32
    %cst_0 = arith.constant 4.000000e+00 : f32
    %1 = arith.maximumf %cst, %0 : f32
    %2 = arith.minimumf %cst_0, %1 : f32
    %c0_1 = arith.constant 0 : index
    %c0_2 = arith.constant 0 : index
    %3 = vector.load %arg1[%c0_1, %c0_2] : memref<1x10xf32, #tpu.memory_space<vmem>>, vector<1x10xf32>
    %c0_3 = arith.constant 0 : index
    %c0_4 = arith.constant 0 : index
    %4 = vector.load %arg2[%c0_3, %c0_4] : memref<1x10xf32, #tpu.memory_space<vmem>>, vector<1x10xf32>
    %5 = arith.addf %3, %4 : vector<1x10xf32>
    %6 = vector.broadcast %2 : f32 to vector<1x10xf32>
    %7 = arith.divf %5, %6 : vector<1x10xf32>
    %cst_5 = arith.constant dense<0xFF800000> : vector<1xf32>
    %8 = vector.multi_reduction <maximumf>, %7, %cst_5 [1] : vector<1x10xf32> to vector<1xf32>
    %9 = vector.shape_cast %8 : vector<1xf32> to vector<1x1xf32>
    %10 = vector.broadcast %9 : vector<1x1xf32> to vector<1x10xf32>
    %11 = arith.subf %7, %10 : vector<1x10xf32>
    %12 = math.exp %11 : vector<1x10xf32>
    %cst_6 = arith.constant dense<0.000000e+00> : vector<1xf32>
    %13 = vector.multi_reduction <add>, %12, %cst_6 [1] : vector<1x10xf32> to vector<1xf32>
    %14 = vector.shape_cast %13 : vector<1xf32> to vector<1x1xf32>
    %15 = vector.broadcast %14 : vector<1x1xf32> to vector<1x10xf32>
    %16 = arith.divf %12, %15 : vector<1x10xf32>
    %17 = tpu.iota {dimensions = array<i32: 1>} : vector<1x10xi32>
    %18 = vector.broadcast %9 : vector<1x1xf32> to vector<1x10xf32>
    %19 = arith.cmpf oeq, %7, %18 : vector<1x10xf32>
    %c10_i32 = arith.constant 10 : i32
    %20 = vector.broadcast %c10_i32 : i32 to vector<1x10xi32>
    %21 = arith.select %19, %17, %20 : vector<1x10xi1>, vector<1x10xi32>
    %cst_7 = arith.constant dense<2147483647> : vector<1xi32>
    %22 = vector.multi_reduction <minsi>, %21, %cst_7 [1] : vector<1x10xi32> to vector<1xi32>
    %23 = vector.shape_cast %22 : vector<1xi32> to vector<1x1xi32>
    %24 = vector.broadcast %23 : vector<1x1xi32> to vector<1x10xi32>
    %25 = arith.cmpi eq, %17, %24 : vector<1x10xi32>
    %cst_8 = arith.constant 0xFF800000 : f32
    %26 = vector.broadcast %cst_8 : f32 to vector<1x10xf32>
    %27 = arith.select %25, %26, %7 : vector<1x10xi1>, vector<1x10xf32>
    %cst_9 = arith.constant dense<0xFF800000> : vector<1xf32>
    %28 = vector.multi_reduction <maximumf>, %27, %cst_9 [1] : vector<1x10xf32> to vector<1xf32>
    %29 = vector.shape_cast %28 : vector<1xf32> to vector<1x1xf32>
    %30 = vector.broadcast %29 : vector<1x1xf32> to vector<1x10xf32>
    %31 = arith.cmpf oeq, %27, %30 : vector<1x10xf32>
    %c10_i32_10 = arith.constant 10 : i32
    %32 = vector.broadcast %c10_i32_10 : i32 to vector<1x10xi32>
    %33 = arith.select %31, %17, %32 : vector<1x10xi1>, vector<1x10xi32>
    %cst_11 = arith.constant dense<2147483647> : vector<1xi32>
    %34 = vector.multi_reduction <minsi>, %33, %cst_11 [1] : vector<1x10xi32> to vector<1xi32>
    %35 = vector.shape_cast %34 : vector<1xi32> to vector<1x1xi32>
    %36 = vector.broadcast %23 : vector<1x1xi32> to vector<1x10xi32>
    %37 = arith.cmpi eq, %17, %36 : vector<1x10xi32>
    %cst_12 = arith.constant 0.000000e+00 : f32
    %38 = vector.broadcast %cst_12 : f32 to vector<1x10xf32>
    %39 = arith.select %37, %16, %38 : vector<1x10xi1>, vector<1x10xf32>
    %cst_13 = arith.constant dense<0.000000e+00> : vector<1xf32>
    %40 = vector.multi_reduction <add>, %39, %cst_13 [1] : vector<1x10xf32> to vector<1xf32>
    %41 = vector.shape_cast %40 : vector<1xf32> to vector<1x1xf32>
    %42 = vector.broadcast %35 : vector<1x1xi32> to vector<1x10xi32>
    %43 = arith.cmpi eq, %17, %42 : vector<1x10xi32>
    %cst_14 = arith.constant 0.000000e+00 : f32
    %44 = vector.broadcast %cst_14 : f32 to vector<1x10xf32>
    %45 = arith.select %43, %16, %44 : vector<1x10xi1>, vector<1x10xf32>
    %cst_15 = arith.constant dense<0.000000e+00> : vector<1xf32>
    %46 = vector.multi_reduction <add>, %45, %cst_15 [1] : vector<1x10xf32> to vector<1xf32>
    %47 = vector.shape_cast %46 : vector<1xf32> to vector<1x1xf32>
    %48 = tpu.iota {dimensions = array<i32: 0>} : vector<10x10xi32>
    %c0_16 = arith.constant 0 : index
    %c0_17 = arith.constant 0 : index
    %49 = vector.load %arg3[%c0_16, %c0_17] : memref<10x10xf32, #tpu.memory_space<vmem>>, vector<10x10xf32>
    %50 = vector.broadcast %23 : vector<1x1xi32> to vector<10x10xi32>
    %51 = arith.cmpi eq, %48, %50 : vector<10x10xi32>
    %cst_18 = arith.constant 0.000000e+00 : f32
    %52 = vector.broadcast %cst_18 : f32 to vector<10x10xf32>
    %53 = arith.select %51, %49, %52 : vector<10x10xi1>, vector<10x10xf32>
    %cst_19 = arith.constant dense<0.000000e+00> : vector<10xf32>
    %54 = vector.multi_reduction <add>, %53, %cst_19 [0] : vector<10x10xf32> to vector<10xf32>
    %55 = vector.shape_cast %54 : vector<10xf32> to vector<1x10xf32>
    %56 = vector.broadcast %35 : vector<1x1xi32> to vector<10x10xi32>
    %57 = arith.cmpi eq, %48, %56 : vector<10x10xi32>
    %cst_20 = arith.constant 0.000000e+00 : f32
    %58 = vector.broadcast %cst_20 : f32 to vector<10x10xf32>
    %59 = arith.select %57, %49, %58 : vector<10x10xi1>, vector<10x10xf32>
    %cst_21 = arith.constant dense<0.000000e+00> : vector<10xf32>
    %60 = vector.multi_reduction <add>, %59, %cst_21 [0] : vector<10x10xf32> to vector<10xf32>
    %61 = vector.shape_cast %60 : vector<10xf32> to vector<1x10xf32>
    %62 = vector.broadcast %41 : vector<1x1xf32> to vector<1x10xf32>
    %63 = arith.mulf %62, %55 : vector<1x10xf32>
    %c0_22 = arith.constant 0 : index
    %c0_23 = arith.constant 0 : index
    %64 = vector.load %arg4[%c0_22, %c0_23] : memref<2x10xf32, #tpu.memory_space<vmem>>, vector<1x10xf32>
    tpu.vector_store %arg4[%c0_22, %c0_23], %63 {strides = array<i32>} : memref<2x10xf32, #tpu.memory_space<vmem>>, vector<1x10xf32>,
    %65 = vector.broadcast %47 : vector<1x1xf32> to vector<1x10xf32>
    %66 = arith.mulf %65, %61 : vector<1x10xf32>
    %c1 = arith.constant 1 : index
    %c0_24 = arith.constant 0 : index
    %67 = vector.load %arg4[%c1, %c0_24] : memref<2x10xf32, #tpu.memory_space<vmem>>, vector<1x10xf32>
    tpu.vector_store %arg4[%c1, %c0_24], %66 {strides = array<i32>} : memref<2x10xf32, #tpu.memory_space<vmem>>, vector<1x10xf32>,
    return
  }
}

</mosaic_0001>

<llo_original>
// kernel: hadamard_expansion_forward.1
$region0: #{hadamard_expansion_forward.1}
  #allocation0 [shape = 'u32[]', space=smem, size = 0x4, offset = 0x4, fixed_abs, tag = 'smem constant byte address 0x4 - core index']
  #allocation1 [shape = 'u32[72,128]{1,0:T(1,128)}', space=vmem, size = 0x9000, scoped, tag = 'internal scratch']
  #allocation2 [shape = 'f32[1]{0:T(128)S(6)}', space=smem, size = 0x200, scoped, tag = 'scoped memory for hadamard_expansion_forward.1']
  %s0 = inlined_call_operand.<no memory space> [shape: f32[1], index: 0, kind: input, shape index: {}]
  %s1 = inlined_call_operand.vmem [shape: f32[1,10], index: 1, kind: input, shape index: {}]
  %s2 = inlined_call_operand.vmem [shape: f32[1,10], index: 2, kind: input, shape index: {}]
  %s3 = inlined_call_operand.vmem [shape: f32[10,10], index: 3, kind: input, shape index: {}]
  %s4 = inlined_call_operand.vmem [shape: f32[2,10], index: 4, kind: output, shape index: {}]
  %s5 = sld [smem:[#allocation0]]
  $region26: #{hadamard_expansion_forward.1} parent=0
    _
  %s7 = ssub.s32 1, %s5
  %s8 = scalar_select 0, %s7, %s5
  %9 = sst [smem:[#allocation2]] %s0
  // Predicated region
  $region2: #{hadamard_expansion_forward.1} parent=0 // pred_check
    _
  $region3: #{hadamard_expansion_forward.1} parent=0 // pred_check_branch
    %11 = sbr.rel (0) target = $region5
  $region4: #{hadamard_expansion_forward.1} parent=0 // pred_region
    _
  $region5: #{hadamard_expansion_forward.1} parent=0 // pred_fallthru
    _
  // Predicated region
  $region6: #{hadamard_expansion_forward.1} parent=0 // pred_check
    _
  $region7: #{hadamard_expansion_forward.1} parent=0 // pred_check_branch
    %13 = sbr.rel (0) target = $region9
  $region8: #{hadamard_expansion_forward.1} parent=0 // pred_region
    _
  $region9: #{hadamard_expansion_forward.1} parent=0 // pred_fallthru
    _
  // Predicated region
  $region10: #{hadamard_expansion_forward.1} parent=0 // pred_check
    _
  $region11: #{hadamard_expansion_forward.1} parent=0 // pred_check_branch
    %15 = sbr.rel (0) target = $region13
  $region12: #{hadamard_expansion_forward.1} parent=0 // pred_region
    _
  $region13: #{hadamard_expansion_forward.1} parent=0 // pred_fallthru
    _
  // Predicated region
  $region14: #{hadamard_expansion_forward.1} parent=0 // pred_check
    _
  $region15: #{hadamard_expansion_forward.1} parent=0 // pred_check_branch
    %17 = sbr.rel (0) target = $region17
  $region16: #{hadamard_expansion_forward.1} parent=0 // pred_region
    _
  $region17: #{hadamard_expansion_forward.1} parent=0 // pred_fallthru
    _
  %s18 = sld [smem:[#allocation2]]
  %s19 = smax.f32 %s18, 0.1
  %s20 = smin.f32 %s19, 4.0
  %v21 = vld [vmem:[%s1] sm:$0x1]
  %v22 = vld [vmem:[%s2] sm:$0x1]
  %v23 = vadd.f32 %v21, %v22
  %v24 = vstv %s20
  %v25 = vrcp.pop %v24
  %v26 = vmul.f32 %v24, %v25
  %v27 = vsub.f32 1.0, %v26
  %v28 = vmul.f32 %v25, %v27
  %v29 = vadd.f32 %v25, %v28
  %vm30 = vweird.f32 %v24
  %vm31 = vweird.f32 %v25
  %vm32 = vmor %vm30, %vm31
  %v33 = vsel %vm32, %v25, %v29
  %v34 = vand.u32 2147483647, %v24
  %vm35 = vcmp.eq.f32.partialorder %v34, 8.507059e+37
  %v36 = vand.u32 %v24, 2147483648
  %v37 = vor.u32 1.1754944e-38, %v36
  %v38 = vsel %vm35, %v37, %v33
  %v39 = vmul.f32 %v23, %v38
  %vm40 = vcmask 73728
  %v41 = vsel %vm40, %v39, -inf
  %42 = vmax.xlane.f32.xlu0 %v41
  %v43 = vpop.xlane.xlu0 %42
  %v44 = vsub.f32 %v39, %v43
  %v45 = vmul.f32 %v44, 1.442695
  %v46 = vpow.pop %v45
  %v47 = vsel %vm40, %v46, 0.0
  %48 = vadd.xlane.f32.xlu0 %v47
  %v49 = vpop.xlane.xlu0 %48
  %v50 = vrcp.pop %v49
  %v51 = vmul.f32 %v49, %v50
  %v52 = vsub.f32 1.0, %v51
  %v53 = vmul.f32 %v50, %v52
  %v54 = vadd.f32 %v50, %v53
  %vm55 = vweird.f32 %v49
  %vm56 = vweird.f32 %v50
  %vm57 = vmor %vm55, %vm56
  %v58 = vsel %vm57, %v50, %v54
  %v59 = vand.u32 2147483647, %v49
  %vm60 = vcmp.eq.f32.partialorder %v59, 8.507059e+37
  %v61 = vand.u32 %v49, 2147483648
  %v62 = vor.u32 1.1754944e-38, %v61
  %v63 = vsel %vm60, %v62, %v58
  %v64 = vmul.f32 %v46, %v63
  %v65 = vlaneseq
  %v66 = vand.u32 %v65, 127
  %vm67 = vcmp.eq.f32.partialorder %v39, %v43
  %v68 = vsel %vm67, %v66, 10
  %v69 = vsel %vm40, %v68, 2147483647
  %v70 = vand.u32 %v69, 65535
  %v71 = vshra.s32 %v69, 16
  %v72 = vcvt.s32.f32 %v70
  %v73 = vcvt.s32.f32 %v71
  %74 = vmin.xlane.f32.xlu0 %v73
  %v75 = vpop.xlane.xlu0 %74
  %vm76 = vcmp.eq.f32.partialorder %v73, %v75
  %v77 = vsel %vm76, %v72, inf
  %78 = vmin.xlane.f32.xlu0 %v77
  %v79 = vpop.xlane.xlu0 %78
  %v80 = vcvt.f32.s32 %v79
  %v81 = vcvt.f32.s32 %v75
  %v82 = vshll.u32 %v81, 16
  %v83 = vadd.s32 %v82, %v80
  %vm84 = vcmp.eq.s32.totalorder %v66, %v83
  %v85 = vsel %vm84, -inf, %v39
  %v86 = vsel %vm40, %v85, -inf
  %87 = vmax.xlane.f32.xlu0 %v86
  %v88 = vpop.xlane.xlu0 %87
  %vm89 = vcmp.eq.f32.partialorder %v85, %v88
  %v90 = vsel %vm89, %v66, 10
  %v91 = vsel %vm40, %v90, 2147483647
  %v92 = vand.u32 %v91, 65535
  %v93 = vshra.s32 %v91, 16
  %v94 = vcvt.s32.f32 %v92
  %v95 = vcvt.s32.f32 %v93
  %96 = vmin.xlane.f32.xlu0 %v95
  %v97 = vpop.xlane.xlu0 %96
  %vm98 = vcmp.eq.f32.partialorder %v95, %v97
  %v99 = vsel %vm98, %v94, inf
  %100 = vmin.xlane.f32.xlu0 %v99
  %v101 = vpop.xlane.xlu0 %100
  %v102 = vcvt.f32.s32 %v101
  %v103 = vcvt.f32.s32 %v97
  %v104 = vshll.u32 %v103, 16
  %v105 = vadd.s32 %v104, %v102
  %v106 = vsel %vm84, %v64, 0.0
  %v107 = vsel %vm40, %v106, 0.0
  %108 = vadd.xlane.f32.xlu0 %v107
  %v109 = vpop.xlane.xlu0 %108
  %vm110 = vcmp.eq.s32.totalorder %v66, %v105
  %v111 = vsel %vm110, %v64, 0.0
  %v112 = vsel %vm40, %v111, 0.0
  %113 = vadd.xlane.f32.xlu0 %v112
  %v114 = vpop.xlane.xlu0 %113
  %v115 = vlaneseq
  %v116 = vshrl.u32 %v115, 7
  %v117 = vadd.s32 %v116, 8
  %v118 = vld [vmem:[%s3] sm:$0xff]
  %v119 = vld [vmem:[%s3 + $0x8] sm:$0x3]
  %v120 = vperm.slane %v83, 0
  %vm121 = vcmp.eq.s32.totalorder %v116, %v120
  %vm122 = vcmp.eq.s32.totalorder %v117, %v120
  %v123 = vsel %vm121, %v118, 0.0
  %v124 = vsel %vm122, %v119, 0.0
  %vm125 = vcmask 80896
  %v126 = vsel %vm125, %v123, 0.0
  %vm127 = vcmask 74752
  %v128 = vsel %vm127, %v124, 0.0
  %v129 = vadd.f32 %v126, %v128
  %v130 = vrot.slane %v129, 4
  %v131 = vadd.f32 %v129, %v130
  %v132 = vrot.slane %v131, 2
  %v133 = vadd.f32 %v131, %v132
  %v134 = vrot.slane %v133, 1
  %v135 = vadd.f32 %v133, %v134
  %v136 = vperm.slane %v105, 0
  %vm137 = vcmp.eq.s32.totalorder %v116, %v136
  %vm138 = vcmp.eq.s32.totalorder %v117, %v136
  %v139 = vsel %vm137, %v118, 0.0
  %v140 = vsel %vm138, %v119, 0.0
  %v141 = vsel %vm125, %v139, 0.0
  %v142 = vsel %vm127, %v140, 0.0
  %v143 = vadd.f32 %v141, %v142
  %v144 = vrot.slane %v143, 4
  %v145 = vadd.f32 %v143, %v144
  %v146 = vrot.slane %v145, 2
  %v147 = vadd.f32 %v145, %v146
  %v148 = vrot.slane %v147, 1
  %v149 = vadd.f32 %v147, %v148
  %v150 = vmul.f32 %v109, %v135
  %151 = vst.msk [vmem:[%s4] sm:$0x1] %vm40, %v150
  %v152 = vmul.f32 %v114, %v149
  %153 = vst.msk [vmem:[%s4 + $0x1] sm:$0x1] %vm40, %v152
  // Predicated region
  $region18: #{hadamard_expansion_forward.1} parent=0 // pred_check
    _
  $region19: #{hadamard_expansion_forward.1} parent=0 // pred_check_branch
    %155 = sbr.rel (0) target = $region21
  $region20: #{hadamard_expansion_forward.1} parent=0 // pred_region
    _
  $region21: #{hadamard_expansion_forward.1} parent=0 // pred_fallthru
    _
  // Predicated region
  $region22: #{hadamard_expansion_forward.1} parent=0 // pred_check
    _
  $region23: #{hadamard_expansion_forward.1} parent=0 // pred_check_branch
    %157 = sbr.rel (0) target = $region25
  $region24: #{hadamard_expansion_forward.1} parent=0 // pred_region
    _
  $region25: #{hadamard_expansion_forward.1} parent=0 // pred_fallthru
    _

</llo_original>
